<compile_context>
chip_gen: v7x
topology: tpu7x:2x2x1
jax: 0.10.0
libtpu: 0.0.40
codegen_flags: <defaults>
</compile_context>

<pallas_src>
import functools

import jax
import jax.numpy as jnp
from jax.experimental import pallas as pl
from jax.experimental.pallas import tpu as pltpu


# Raise the scoped-VMEM budget above v5e's 16 MiB default while staying under
# v7x's 64 MiB physical VMEM.
_VMEM_LIMIT_BYTES = 48 * 1024 * 1024


def _round_up(x, m):
    return ((x + m - 1) // m) * m


def _cparams(dims):
    return pltpu.CompilerParams(dimension_semantics=dims,
                                vmem_limit_bytes=_VMEM_LIMIT_BYTES)


def _pick_row_tile(HW, row_tile):
    """Largest multiple-of-8 row tile <= row_tile; prefer exact divisors of HW,
    otherwise fall back to a cdiv grid with a partial tail block."""
    cap = min(row_tile, _round_up(HW, 8))
    cap = max(8, (cap // 8) * 8)
    for tr in range(cap, 7, -8):
        if HW % tr == 0:
            return tr
    return cap


# ---------------------------------------------------------------------------
# Kernel 1: fused leading 1x1 convs of all four branches (+ BN fold + ReLU).
# ---------------------------------------------------------------------------
def _lead_1x1_kernel(x_ref, w_ref, b_ref, o0_ref, o1_ref, o2_ref, o3_ref, *,
                     inter):
    """x: (1, TR, Cin) f32; w: (Cin, 4*inter) bf16; b: (1, 4*inter) f32.
    o*: (1, TR, inter) bf16, one per branch."""
    x = x_ref[0].astype(jnp.bfloat16)                       # one cast per tile
    acc = jnp.dot(x, w_ref[...], preferred_element_type=jnp.float32)
    y = jnp.maximum(acc + b_ref[...], 0.0).astype(jnp.bfloat16)
    for i, o_ref in enumerate((o0_ref, o1_ref, o2_ref, o3_ref)):
        o_ref[0] = y[:, i * inter:(i + 1) * inter]


def fused_lead_1x1(x_flat, w_cat, b_cat, inter, row_tile):
    N, HW, Cin = x_flat.shape
    TR = _pick_row_tile(HW, row_tile)
    NT = pl.cdiv(HW, TR)
    kern = functools.partial(_lead_1x1_kernel, inter=inter)
    return pl.pallas_call(
        kern,
        out_shape=tuple(jax.ShapeDtypeStruct((N, HW, inter), jnp.bfloat16)
                        for _ in range(4)),
        grid=(N, NT),
        in_specs=[
            pl.BlockSpec((1, TR, Cin), lambda n, t: (n, t, 0)),
            pl.BlockSpec((Cin, 4 * inter), lambda n, t: (0, 0)),
            pl.BlockSpec((1, 4 * inter), lambda n, t: (0, 0)),
        ],
        out_specs=tuple(pl.BlockSpec((1, TR, inter), lambda n, t: (n, t, 0))
                        for _ in range(4)),
        compiler_params=_cparams(("parallel", "parallel")),
    )(x_flat, w_cat, b_cat)


# ---------------------------------------------------------------------------
# Kernel 2: one fused spatial-conv chain per branch.  All intermediates and
# the zero-padded windows live only in bf16 VMEM scratch.
# ---------------------------------------------------------------------------
def _branch_chain_kernel(*refs, stage_cfgs, n_stages, H, W):
    x_ref = refs[0]
    w_refs = [refs[1 + 2 * i] for i in range(n_stages)]
    b_refs = [refs[2 + 2 * i] for i in range(n_stages)]
    out_ref = refs[1 + 2 * n_stages]
    pad_refs = refs[2 + 2 * n_stages:]

    cur = x_ref[0]                                           # (H, W, C) bf16
    for si, (KH, KW, ph, pw, dh, dw, relu) in enumerate(stage_cfgs):
        w_ref, b_ref, pad_ref = w_refs[si], b_refs[si], pad_refs[si]
        Cin = cur.shape[-1]
        Cout = w_ref.shape[-1]
        # Zero-padded input window: written once per stage in bf16, so the
        # tap loop below needs no per-tap casts and no host-side jnp.pad.
        pad_ref[...] = jnp.zeros(pad_ref.shape, pad_ref.dtype)
        pad_ref[ph:ph + H, pw:pw + W, :] = cur
        acc = jnp.zeros((H * W, Cout), jnp.float32)
        for kh in range(KH):
            for kw in range(KW):
                xs = pad_ref[kh * dh:kh * dh + H, kw * dw:kw * dw + W, :]
                xs = xs.reshape(H * W, Cin)
                acc = acc + jnp.dot(xs, w_ref[kh * KW + kw],
                                    preferred_element_type=jnp.float32)
        y = acc + b_ref[...]                                 # f32 epilogue
        if relu:
            y = jnp.maximum(y, 0.0)
        cur = y.reshape(H, W, Cout).astype(jnp.bfloat16)
    out_ref[0] = cur


def branch_chain(x_br, stage_ws, stage_bs, stage_cfgs):
    """x_br: (N,H,W,C) bf16.  stage_ws[i]: (KH*KW, Cin, Cout) bf16.
    stage_bs[i]: (1, Cout) f32.  stage_cfgs[i]: (KH,KW,ph,pw,dh,dw,relu)."""
    N, H, W, C0 = x_br.shape
    n_stages = len(stage_cfgs)
    for (KH, KW, ph, pw, dh, dw, _relu) in stage_cfgs:
        assert H + 2 * ph - dh * (KH - 1) == H, "only spatial-preserving convs"
        assert W + 2 * pw - dw * (KW - 1) == W, "only spatial-preserving convs"

    in_specs = [pl.BlockSpec((1, H, W, C0), lambda n: (n, 0, 0, 0))]
    args = [x_br]
    scratch = []
    for (KH, KW, ph, pw, dh, dw, _relu), w, b in zip(stage_cfgs, stage_ws,
                                                     stage_bs):
        in_specs.append(pl.BlockSpec(w.shape, lambda n: (0, 0, 0)))
        in_specs.append(pl.BlockSpec(b.shape, lambda n: (0, 0)))
        args += [w, b]
        scratch.append(pltpu.VMEM((H + 2 * ph, W + 2 * pw, w.shape[1]),
                                  jnp.bfloat16))
    Cout = stage_ws[-1].shape[-1]
    kern = functools.partial(_branch_chain_kernel,
                             stage_cfgs=tuple(stage_cfgs),
                             n_stages=n_stages, H=H, W=W)
    return pl.pallas_call(
        kern,
        out_shape=jax.ShapeDtypeStruct((N, H, W, Cout), jnp.bfloat16),
        grid=(N,),
        in_specs=in_specs,
        out_specs=pl.BlockSpec((1, H, W, Cout), lambda n: (n, 0, 0, 0)),
        scratch_shapes=scratch,
        compiler_params=_cparams(("parallel",)),
    )(*args)


# ---------------------------------------------------------------------------
# Kernel 3: fused ConvLinear (split over the 4 branches, no concat), shortcut
# 1x1 conv, residual add (scale folded into ConvLinear weights) and ReLU.
# ---------------------------------------------------------------------------
def _final_kernel(b0_ref, b1_ref, b2_ref, b3_ref, x_ref,
                  w0_ref, w1_ref, w2_ref, w3_ref, ws_ref, bias_ref, o_ref):
    def mm(a, w_ref):
        return jnp.dot(a, w_ref[...], preferred_element_type=jnp.float32)

    # TODO(synk): pair branch activations into K=2*inter chunks for fuller
    #             256-wide MXU utilisation on v6e/v7x.
    acc = (mm(b0_ref[0], w0_ref) + mm(b1_ref[0], w1_ref)
           + mm(b2_ref[0], w2_ref) + mm(b3_ref[0], w3_ref)
           + mm(x_ref[0].astype(jnp.bfloat16), ws_ref))
    o_ref[0] = jnp.maximum(acc + bias_ref[...], 0.0).astype(o_ref.dtype)


def conv_linear_shortcut_residual(branches_flat, x_flat, wl_parts, ws, bias,
                                  row_tile):
    N, HW, Cin = x_flat.shape
    inter = branches_flat[0].shape[-1]
    Cout = ws.shape[-1]
    TR = _pick_row_tile(HW, row_tile)
    NT = pl.cdiv(HW, TR)

    act_spec = lambda c: pl.BlockSpec((1, TR, c), lambda n, t: (n, t, 0))
    w_spec = lambda c: pl.BlockSpec((c, Cout), lambda n, t: (0, 0))

    return pl.pallas_call(
        _final_kernel,
        out_shape=jax.ShapeDtypeStruct((N, HW, Cout), jnp.float32),
        grid=(N, NT),
        in_specs=([act_spec(inter)] * 4 + [act_spec(Cin)]
                  + [w_spec(inter)] * 4 + [w_spec(Cin)]
                  + [pl.BlockSpec((1, Cout), lambda n, t: (0, 0))]),
        out_specs=pl.BlockSpec((1, TR, Cout), lambda n, t: (n, t, 0)),
        compiler_params=_cparams(("parallel", "parallel")),
    )(*branches_flat, x_flat, *wl_parts, ws, bias)


# ---------------------------------------------------------------------------
# BasicRFB_a parameters + host-side folding
# ---------------------------------------------------------------------------
def _make_basic_conv_params(key, cin, cout, ksize):
    kh, kw = ksize
    kw_, kg, kb, km, kv = jax.random.split(key, 5)
    fan_in = cin * kh * kw
    return dict(
        w=jax.random.normal(kw_, (kh, kw, cin, cout), jnp.float32)
        / jnp.sqrt(fan_in),
        gamma=1.0 + 0.1 * jax.random.normal(kg, (cout,), jnp.float32),
        beta=0.1 * jax.random.normal(kb, (cout,), jnp.float32),
        mean=0.1 * jax.random.normal(km, (cout,), jnp.float32),
        var=1.0 + 0.5 * jax.random.uniform(kv, (cout,), jnp.float32),
    )


def init_params(key, in_planes, out_planes):
    inter = in_planes // 4
    specs = {
        "b0_0": (in_planes, inter, (1, 1)),
        "b0_1": (inter, inter, (3, 3)),
        "b1_0": (in_planes, inter, (1, 1)),
        "b1_1": (inter, inter, (3, 1)),
        "b1_2": (inter, inter, (3, 3)),
        "b2_0": (in_planes, inter, (1, 1)),
        "b2_1": (inter, inter, (1, 3)),
        "b2_2": (inter, inter, (3, 3)),
        "b3_0": (in_planes, inter // 2, (1, 1)),
        "b3_1": (inter // 2, inter // 4 * 3, (1, 3)),
        "b3_2": (inter // 4 * 3, inter, (3, 1)),
        "b3_3": (inter, inter, (3, 3)),
        "conv_linear": (4 * inter, out_planes, (1, 1)),
        "shortcut": (in_planes, out_planes, (1, 1)),
    }
    keys = jax.random.split(key, len(specs))
    return {name: _make_basic_conv_params(k, ci, co, ks)
            for (name, (ci, co, ks)), k in zip(specs.items(), keys)}


def _pad_trailing(a, axis, size):
    extra = size - a.shape[axis]
    if extra <= 0:
        return a
    widths = [(0, 0)] * a.ndim
    widths[axis] = (0, extra)
    return jnp.pad(a, widths)


def prepare_params(params, scale, eps=1e-5, pad_channels=True):
    """Fold eval-mode BN into weights/bias, fold the residual scale into
    ConvLinear, zero-pad branch-3's intermediate channels to `inter`
    (lane-dense, exact no-op), cast weights to bf16 (biases stay f32)."""
    inter = params["b0_0"]["w"].shape[-1]
    prepped = {}
    for name, p in params.items():
        s = p["gamma"] / jnp.sqrt(p["var"] + eps)
        w = p["w"] * s                       # scale along Cout (last axis)
        b = p["beta"] - p["mean"] * s
        if name == "conv_linear":
            w = w * scale
            b = b * scale
        if pad_channels:
            if name == "b3_0":               # Cout: inter//2 -> inter
                w = _pad_trailing(w, 3, inter)
                b = _pad_trailing(b, 0, inter)
            elif name == "b3_1":             # Cin & Cout -> inter
                w = _pad_trailing(_pad_trailing(w, 2, inter), 3, inter)
                b = _pad_trailing(b, 0, inter)
            elif name == "b3_2":             # Cin: 3*inter//4 -> inter
                w = _pad_trailing(w, 2, inter)
        prepped[name] = dict(w=w.astype(jnp.bfloat16), b=b.astype(jnp.float32))
    return prepped


_LEAD = ("b0_0", "b1_0", "b2_0", "b3_0")
# (param name, KH, KW, pad_h, pad_w, dil_h, dil_w, relu) per spatial conv.
_CHAINS = (
    (("b0_1", 3, 3, 1, 1, 1, 1, False),),
    (("b1_1", 3, 1, 1, 0, 1, 1, True),
     ("b1_2", 3, 3, 3, 3, 3, 3, False)),
    (("b2_1", 1, 3, 0, 1, 1, 1, True),
     ("b2_2", 3, 3, 3, 3, 3, 3, False)),
    (("b3_1", 1, 3, 0, 1, 1, 1, True),
     ("b3_2", 3, 1, 1, 0, 1, 1, True),
     ("b3_3", 3, 3, 5, 5, 5, 5, False)),
)


def basic_rfb_a_forward(x_nchw, params, scale=0.1, row_tile=512):
    """Pallas implementation.  x_nchw: (N,C,H,W) f32 -> (N,Cout,H,W) f32."""
    prepped = prepare_params(params, scale, pad_channels=True)
    x = jnp.transpose(x_nchw, (0, 2, 3, 1))               # NCHW -> NHWC (f32)
    N, H, W, Cin = x.shape
    inter = prepped["b0_0"]["w"].shape[-1]
    x_flat = x.reshape(N, H * W, Cin)

    # Fused leading 1x1 convs: x is read from HBM once for all four branches.
    w_lead = jnp.concatenate(
        [prepped[n]["w"].reshape(Cin, inter) for n in _LEAD], axis=-1)
    b_lead = jnp.concatenate(
        [prepped[n]["b"] for n in _LEAD]).reshape(1, 4 * inter)
    lead_outs = fused_lead_1x1(x_flat, w_lead, b_lead, inter, row_tile)

    # Per-branch fused spatial-conv chains (intermediates never touch HBM).
    branch_flat = []
    for lead_out, chain in zip(lead_outs, _CHAINS):
        stage_ws, stage_bs, cfgs = [], [], []
        for (name, KH, KW, ph, pw, dh, dw, relu) in chain:
            w = prepped[name]["w"]
            stage_ws.append(w.reshape(KH * KW, w.shape[2], w.shape[3]))
            stage_bs.append(prepped[name]["b"].reshape(1, -1))
            cfgs.append((KH, KW, ph, pw, dh, dw, relu))
        h = branch_chain(lead_out.reshape(N, H, W, inter),
                         stage_ws, stage_bs, cfgs)
        branch_flat.append(h.reshape(N, H * W, inter))

    # Fused ConvLinear + shortcut + residual scale + ReLU tail.
    Cout = prepped["conv_linear"]["w"].shape[-1]
    wl = prepped["conv_linear"]["w"].reshape(4 * inter, Cout)
    wl_parts = [wl[i * inter:(i + 1) * inter] for i in range(4)]
    ws = prepped["shortcut"]["w"].reshape(Cin, Cout)
    bias = (prepped["conv_linear"]["b"]
            + prepped["shortcut"]["b"]).reshape(1, Cout)
    out_flat = conv_linear_shortcut_residual(branch_flat, x_flat, wl_parts,
                                             ws, bias, row_tile)
    return jnp.transpose(out_flat.reshape(N, H, W, Cout), (0, 3, 1, 2))


# ---------------------------------------------------------------------------
# Pure-JAX reference (same folded bf16 weights / bf16 intermediates)
# ---------------------------------------------------------------------------
def _ref_conv(x, w, b, pad, dil, relu):
    out = jax.lax.conv_general_dilated(
        x.astype(jnp.bfloat16), w, window_strides=(1, 1),
        padding=((pad[0], pad[0]), (pad[1], pad[1])),
        rhs_dilation=dil,
        dimension_numbers=("NHWC", "HWIO", "NHWC"),
        preferred_element_type=jnp.float32)
    out = out + b
    if relu:
        out = jnp.maximum(out, 0.0)
    return out


def basic_rfb_a_reference(x_nchw, params, scale=0.1):
    prepped = prepare_params(params, scale, pad_channels=False)
    x = jnp.transpose(x_nchw, (0, 2, 3, 1))
    branches = []
    for lead_name, chain in zip(_LEAD, _CHAINS):
        h = _ref_conv(x, prepped[lead_name]["w"], prepped[lead_name]["b"],
                      (0, 0), (1, 1), True).astype(jnp.bfloat16)
        for (name, _KH, _KW, ph, pw, dh, dw, relu) in chain:
            h = _ref_conv(h, prepped[name]["w"], prepped[name]["b"],
                          (ph, pw), (dh, dw), relu).astype(jnp.bfloat16)
        branches.append(h)
    cat = jnp.concatenate(branches, axis=-1)
    out_lin = _ref_conv(cat, prepped["conv_linear"]["w"],
                        prepped["conv_linear"]["b"], (0, 0), (1, 1), False)
    short = _ref_conv(x, prepped["shortcut"]["w"],
                      prepped["shortcut"]["b"], (0, 0), (1, 1), False)
    out = jnp.maximum(out_lin + short, 0.0)
    return jnp.transpose(out, (0, 3, 1, 2))


# ---------------------------------------------------------------------------
if __name__ == "__main__":
    key = jax.random.PRNGKey(0)
    in_planes, out_planes = 16, 16          # inter_planes = 4
    N, H, W = 2, 16, 16
    kx, kp = jax.random.split(key)

    x = jax.random.normal(kx, (N, in_planes, H, W), jnp.float32)  # NCHW
    params = init_params(kp, in_planes, out_planes)

    # row_tile=96 -> 64-row tiles at this toy spatial size so the multi-tile
    # grid path of the fused lead/tail kernels is exercised.
    out = basic_rfb_a_forward(x, params, scale=0.1, row_tile=96)
    out = jax.block_until_ready(out)
    assert out.shape == (N, out_planes, H, W), out.shape

    ref = basic_rfb_a_reference(x, params, scale=0.1)
    err = float(jnp.max(jnp.abs(out - ref)))
    assert err < 5e-3, f"max abs err vs reference: {err}"

    print("KERNEL_OK")
</pallas_src>

<mosaic_0001>
module attributes {stable_mosaic.version = 11 : i64} {
  func.func @_lead_1x1_kernel(%arg0: i32, %arg1: i32, %arg2: memref<1x64x16xf32, #tpu.memory_space<vmem>>, %arg3: memref<16x16xbf16, #tpu.memory_space<vmem>>, %arg4: memref<1x16xf32, #tpu.memory_space<vmem>>, %arg5: memref<1x64x4xbf16, #tpu.memory_space<vmem>>, %arg6: memref<1x64x4xbf16, #tpu.memory_space<vmem>>, %arg7: memref<1x64x4xbf16, #tpu.memory_space<vmem>>, %arg8: memref<1x64x4xbf16, #tpu.memory_space<vmem>>) attributes {dimension_semantics = [#tpu.dimension_semantics<parallel>, #tpu.dimension_semantics<parallel>], iteration_bounds = array<i64: 2, 4>, scalar_prefetch = 0 : i64, scratch_operands = 0 : i64, tpu.core_type = #tpu.core_type<tc>, window_params = [{transform_indices = @transform_0, window_bounds = array<i64: 1, 64, 16>}, {pipeline_mode = #tpu.pipeline_mode<synchronous>, transform_indices = @transform_1, window_bounds = array<i64: 16, 16>}, {pipeline_mode = #tpu.pipeline_mode<synchronous>, transform_indices = @transform_2, window_bounds = array<i64: 1, 16>}, {transform_indices = @transform_3, window_bounds = array<i64: 1, 64, 4>}, {transform_indices = @transform_4, window_bounds = array<i64: 1, 64, 4>}, {transform_indices = @transform_5, window_bounds = array<i64: 1, 64, 4>}, {transform_indices = @transform_6, window_bounds = array<i64: 1, 64, 4>}]} {
    %c0 = arith.constant 0 : index
    %c0_0 = arith.constant 0 : index
    %c0_1 = arith.constant 0 : index
    %0 = vector.load %arg2[%c0, %c0_0, %c0_1] : memref<1x64x16xf32, #tpu.memory_space<vmem>>, vector<1x64x16xf32>
    %1 = vector.shape_cast %0 : vector<1x64x16xf32> to vector<64x16xf32>
    %2 = arith.truncf %1 : vector<64x16xf32> to vector<64x16xbf16>
    %c0_2 = arith.constant 0 : index
    %c0_3 = arith.constant 0 : index
    %3 = vector.load %arg3[%c0_2, %c0_3] : memref<16x16xbf16, #tpu.memory_space<vmem>>, vector<16x16xbf16>
    %cst = arith.constant dense<0.000000e+00> : vector<64x16xf32>
    %4 = tpu.matmul %2, %3, %cst {dimension_numbers = #tpu.dot_dimension_numbers<[1], [0], [0], [1], [0, 0, 1, 1], [], []>} : vector<64x16xbf16>, vector<16x16xbf16>, vector<64x16xf32> -> vector<64x16xf32>
    %c0_4 = arith.constant 0 : index
    %c0_5 = arith.constant 0 : index
    %5 = vector.load %arg4[%c0_4, %c0_5] : memref<1x16xf32, #tpu.memory_space<vmem>>, vector<1x16xf32>
    %6 = vector.broadcast %5 : vector<1x16xf32> to vector<64x16xf32>
    %7 = arith.addf %4, %6 : vector<64x16xf32>
    %cst_6 = arith.constant 0.000000e+00 : f32
    %8 = vector.broadcast %cst_6 : f32 to vector<64x16xf32>
    %9 = arith.maximumf %7, %8 : vector<64x16xf32>
    %10 = arith.truncf %9 : vector<64x16xf32> to vector<64x16xbf16>
    %11 = vector.extract_strided_slice %10 {offsets = [0, 0], sizes = [64, 4], strides = [1, 1]} : vector<64x16xbf16> to vector<64x4xbf16>
    %c0_7 = arith.constant 0 : index
    %c0_8 = arith.constant 0 : index
    %c0_9 = arith.constant 0 : index
    %12 = vector.load %arg5[%c0_7, %c0_8, %c0_9] : memref<1x64x4xbf16, #tpu.memory_space<vmem>>, vector<1x64x4xbf16>
    %13 = vector.shape_cast %12 : vector<1x64x4xbf16> to vector<64x4xbf16>
    %14 = vector.shape_cast %11 : vector<64x4xbf16> to vector<1x64x4xbf16>
    tpu.vector_store %arg5[%c0_7, %c0_8, %c0_9], %14 {strides = array<i32>} : memref<1x64x4xbf16, #tpu.memory_space<vmem>>, vector<1x64x4xbf16>,
    %15 = vector.extract_strided_slice %10 {offsets = [0, 4], sizes = [64, 4], strides = [1, 1]} : vector<64x16xbf16> to vector<64x4xbf16>
    %c0_10 = arith.constant 0 : index
    %c0_11 = arith.constant 0 : index
    %c0_12 = arith.constant 0 : index
    %16 = vector.load %arg6[%c0_10, %c0_11, %c0_12] : memref<1x64x4xbf16, #tpu.memory_space<vmem>>, vector<1x64x4xbf16>
    %17 = vector.shape_cast %16 : vector<1x64x4xbf16> to vector<64x4xbf16>
    %18 = vector.shape_cast %15 : vector<64x4xbf16> to vector<1x64x4xbf16>
    tpu.vector_store %arg6[%c0_10, %c0_11, %c0_12], %18 {strides = array<i32>} : memref<1x64x4xbf16, #tpu.memory_space<vmem>>, vector<1x64x4xbf16>,
    %19 = vector.extract_strided_slice %10 {offsets = [0, 8], sizes = [64, 4], strides = [1, 1]} : vector<64x16xbf16> to vector<64x4xbf16>
    %c0_13 = arith.constant 0 : index
    %c0_14 = arith.constant 0 : index
    %c0_15 = arith.constant 0 : index
    %20 = vector.load %arg7[%c0_13, %c0_14, %c0_15] : memref<1x64x4xbf16, #tpu.memory_space<vmem>>, vector<1x64x4xbf16>
    %21 = vector.shape_cast %20 : vector<1x64x4xbf16> to vector<64x4xbf16>
    %22 = vector.shape_cast %19 : vector<64x4xbf16> to vector<1x64x4xbf16>
    tpu.vector_store %arg7[%c0_13, %c0_14, %c0_15], %22 {strides = array<i32>} : memref<1x64x4xbf16, #tpu.memory_space<vmem>>, vector<1x64x4xbf16>,
    %23 = vector.extract_strided_slice %10 {offsets = [0, 12], sizes = [64, 4], strides = [1, 1]} : vector<64x16xbf16> to vector<64x4xbf16>
    %c0_16 = arith.constant 0 : index
    %c0_17 = arith.constant 0 : index
    %c0_18 = arith.constant 0 : index
    %24 = vector.load %arg8[%c0_16, %c0_17, %c0_18] : memref<1x64x4xbf16, #tpu.memory_space<vmem>>, vector<1x64x4xbf16>
    %25 = vector.shape_cast %24 : vector<1x64x4xbf16> to vector<64x4xbf16>
    %26 = vector.shape_cast %23 : vector<64x4xbf16> to vector<1x64x4xbf16>
    tpu.vector_store %arg8[%c0_16, %c0_17, %c0_18], %26 {strides = array<i32>} : memref<1x64x4xbf16, #tpu.memory_space<vmem>>, vector<1x64x4xbf16>,
    return
  }
  func.func @transform_0(%arg0: i32, %arg1: i32) -> (i32, i32, i32) {
    %c0_i32 = arith.constant 0 : i32
    %c0_i32_0 = arith.constant 0 : i32
    return %arg0, %arg1, %c0_i32 : i32, i32, i32
  }
  func.func @transform_1(%arg0: i32, %arg1: i32) -> (i32, i32) {
    %c0_i32 = arith.constant 0 : i32
    %c0_i32_0 = arith.constant 0 : i32
    %c0_i32_1 = arith.constant 0 : i32
    return %c0_i32, %c0_i32_0 : i32, i32
  }
  func.func @transform_2(%arg0: i32, %arg1: i32) -> (i32, i32) {
    %c0_i32 = arith.constant 0 : i32
    %c0_i32_0 = arith.constant 0 : i32
    %c0_i32_1 = arith.constant 0 : i32
    return %c0_i32, %c0_i32_0 : i32, i32
  }
  func.func @transform_3(%arg0: i32, %arg1: i32) -> (i32, i32, i32) {
    %c0_i32 = arith.constant 0 : i32
    %c0_i32_0 = arith.constant 0 : i32
    return %arg0, %arg1, %c0_i32 : i32, i32, i32
  }
  func.func @transform_4(%arg0: i32, %arg1: i32) -> (i32, i32, i32) {
    %c0_i32 = arith.constant 0 : i32
    %c0_i32_0 = arith.constant 0 : i32
    return %arg0, %arg1, %c0_i32 : i32, i32, i32
  }
  func.func @transform_5(%arg0: i32, %arg1: i32) -> (i32, i32, i32) {
    %c0_i32 = arith.constant 0 : i32
    %c0_i32_0 = arith.constant 0 : i32
    return %arg0, %arg1, %c0_i32 : i32, i32, i32
  }
  func.func @transform_6(%arg0: i32, %arg1: i32) -> (i32, i32, i32) {
    %c0_i32 = arith.constant 0 : i32
    %c0_i32_0 = arith.constant 0 : i32
    return %arg0, %arg1, %c0_i32 : i32, i32, i32
  }
}

</mosaic_0001>

<llo_original>
// kernel: tpu_custom_call.1
$region0: #{tpu_custom_call.1}
  #allocation0 [shape = 'u32[]', space=smem, size = 0x4, offset = 0x4, fixed_abs, tag = 'smem constant byte address 0x4 - core index']
  #allocation1 [shape = 'u32[144,128]{1,0:T(1,128)}', space=vmem, size = 0x12000, scoped, tag = 'internal scratch']
  %s0 = inlined_call_operand.vmem [shape: f32[2,256,16], index: 0, kind: input, shape index: {}]
  %s1 = inlined_call_operand.vmem [shape: bf16[16,16], index: 1, kind: input, shape index: {}]
  %s2 = inlined_call_operand.vmem [shape: f32[1,16], index: 2, kind: input, shape index: {}]
  %s3 = inlined_call_operand.vmem [shape: bf16[2,256,4], index: 3, kind: output, shape index: {0}]
  %s4 = inlined_call_operand.vmem [shape: bf16[2,256,4], index: 4, kind: output, shape index: {1}]
  %s5 = inlined_call_operand.vmem [shape: bf16[2,256,4], index: 5, kind: output, shape index: {2}]
  %s6 = inlined_call_operand.vmem [shape: bf16[2,256,4], index: 6, kind: output, shape index: {3}]
  %7 = xla_tuple %s3, %s4, %s5, %s6
  %s8 = sld [smem:[#allocation0]]
  $region69: #{tpu_custom_call.1} parent=0
    _
  %s10 = ssub.s32 1, %s8
  %s11 = scalar_select 0, %s10, %s8
  loop: start=0, step=1, limit=10
  $region2: #{tpu_custom_call.1} parent=0 // loop_pre_header
    _
  $region3: #{tpu_custom_call.1} parent=0 // loop_header
    %s13 = sphi 0, %s17
    %p14 = scmp.ge.s32.totalorder %s13, 10
    %s20 = sphi 0, %s32
    %s21 = sphi 0, %s28
    %s22 = sphi 0, %s20
    %s23 = sphi 0, %s21
    %s24 = sphi 0, %s22
    %s25 = sphi 0, %s23
    %s37 = sphi 0, %s39
    %s40 = sphi 0, %s37
    %s41 = sphi 0, %s40
    %s57 = sphi 0, %s41
    %s61 = sphi 0, %s61
    %s63 = sphi 0, %s61
    %s64 = sphi 0, %s63
    %s78 = sphi 0, %s64
    %s82 = sphi 0, %s82
    %s84 = sphi 0, %s82
    %s85 = sphi 0, %s84
    %s99 = sphi 0, %s85
    %s107 = sphi 0, %s109
    %s110 = sphi 0, %s107
    %s111 = sphi 0, %s110
    %s127 = sphi 0, %s111
    %s135 = sphi 0, %s137
    %s138 = sphi 0, %s135
    %s139 = sphi 0, %s138
    %s155 = sphi 0, %s139
    %s163 = sphi 0, %s165
    %s166 = sphi 0, %s163
    %s167 = sphi 0, %s166
    %s183 = sphi 0, %s167
    %s191 = sphi 0, %s193
    %s194 = sphi 0, %s191
    %s195 = sphi 0, %s194
    %s211 = sphi 0, %s195
  $region4: #{tpu_custom_call.1} parent=0 // loop_header_branch
    %16 = sbr.rel (%p14) target = $region8
  $region5: #{tpu_custom_call.1} parent=0 // loop_body
    %s18 = ssub.s32 %s13, 1
    %s19 = ssub.s32 %s13, 2
    %s26 = sadd.s32 1, %s21
    %p27 = scmp.ge.s32.totalorder %s26, 4
    %s28 = scalar_select %p27, 0, %s26
    %s29 = sadd.s32 1, %s20
    %s30 = scalar_select %p27, %s29, %s20
    %p31 = scmp.ge.s32.totalorder %s30, 2
    %s32 = scalar_select %p31, 0, %s30
    %s33 = ssub.s32 %s20, %s32
    %s34 = ssub.s32 %s21, %s28
    %s35 = sor.u32 %s33, %s34
    %p36 = scmp.eq.s32.totalorder %s35, 0
    %s38 = sadd.s32 %s37, 1
    %s39 = scalar_select %p36, %s37, %s38
    %p42 = pneg %p36
    %p43 = scmp.eq.s32.totalorder %s13, 7
    %p44 = por %p42, %p43
    %p45 = scmp.ne.s32.totalorder %s37, %s40
    %p46 = scmp.eq.s32.totalorder %s13, 0
    %p47 = por %p45, %p46
    %p48 = scmp.ne.s32.totalorder %s37, %s40
    %p49 = scmp.eq.s32.totalorder %s18, 7
    %p50 = por %p48, %p49
    %p51 = scmp.ne.s32.totalorder %s40, %s41
    %p52 = scmp.eq.s32.totalorder %s18, 0
    %p53 = por %p51, %p52
    %p54 = scmp.ne.s32.totalorder %s40, %s41
    %p55 = scmp.eq.s32.totalorder %s19, 7
    %p56 = por %p54, %p55
    %p58 = scmp.ne.s32.totalorder %s41, %s57
    %p59 = scmp.eq.s32.totalorder %s19, 0
    %p60 = por %p58, %p59
    %s62 = sadd.s32 %s61, 1
    %p65 = scmp.eq.s32.totalorder %s13, 7
    %p66 = scmp.ne.s32.totalorder %s61, %s63
    %p67 = scmp.eq.s32.totalorder %s13, 0
    %p68 = por %p66, %p67
    %p69 = scmp.ne.s32.totalorder %s61, %s63
    %p70 = scmp.eq.s32.totalorder %s18, 7
    %p71 = por %p69, %p70
    %p72 = scmp.ne.s32.totalorder %s63, %s64
    %p73 = scmp.eq.s32.totalorder %s18, 0
    %p74 = por %p72, %p73
    %p75 = scmp.ne.s32.totalorder %s63, %s64
    %p76 = scmp.eq.s32.totalorder %s19, 7
    %p77 = por %p75, %p76
    %p79 = scmp.ne.s32.totalorder %s64, %s78
    %p80 = scmp.eq.s32.totalorder %s19, 0
    %p81 = por %p79, %p80
    %s83 = sadd.s32 %s82, 1
    %p86 = scmp.eq.s32.totalorder %s13, 7
    %p87 = scmp.ne.s32.totalorder %s82, %s84
    %p88 = scmp.eq.s32.totalorder %s13, 0
    %p89 = por %p87, %p88
    %p90 = scmp.ne.s32.totalorder %s82, %s84
    %p91 = scmp.eq.s32.totalorder %s18, 7
    %p92 = por %p90, %p91
    %p93 = scmp.ne.s32.totalorder %s84, %s85
    %p94 = scmp.eq.s32.totalorder %s18, 0
    %p95 = por %p93, %p94
    %p96 = scmp.ne.s32.totalorder %s84, %s85
    %p97 = scmp.eq.s32.totalorder %s19, 7
    %p98 = por %p96, %p97
    %p100 = scmp.ne.s32.totalorder %s85, %s99
    %p101 = scmp.eq.s32.totalorder %s19, 0
    %p102 = por %p100, %p101
    %s103 = ssub.s32 %s20, %s32
    %s104 = ssub.s32 %s21, %s28
    %s105 = sor.u32 %s103, %s104
    %p106 = scmp.eq.s32.totalorder %s105, 0
    %s108 = sadd.s32 %s107, 1
    %s109 = scalar_select %p106, %s107, %s108
    %p112 = pneg %p106
    %p113 = scmp.eq.s32.totalorder %s13, 7
    %p114 = por %p112, %p113
    %p115 = scmp.ne.s32.totalorder %s107, %s110
    %p116 = scmp.eq.s32.totalorder %s13, 0
    %p117 = por %p115, %p116
    %p118 = scmp.ne.s32.totalorder %s107, %s110
    %p119 = scmp.eq.s32.totalorder %s18, 7
    %p120 = por %p118, %p119
    %p121 = scmp.ne.s32.totalorder %s110, %s111
    %p122 = scmp.eq.s32.totalorder %s18, 0
    %p123 = por %p121, %p122
    %p124 = scmp.ne.s32.totalorder %s110, %s111
    %p125 = scmp.eq.s32.totalorder %s19, 7
    %p126 = por %p124, %p125
    %p128 = scmp.ne.s32.totalorder %s111, %s127
    %p129 = scmp.eq.s32.totalorder %s19, 0
    %p130 = por %p128, %p129
    %s131 = ssub.s32 %s20, %s32
    %s132 = ssub.s32 %s21, %s28
    %s133 = sor.u32 %s131, %s132
    %p134 = scmp.eq.s32.totalorder %s133, 0
    %s136 = sadd.s32 %s135, 1
    %s137 = scalar_select %p134, %s135, %s136
    %p140 = pneg %p134
    %p141 = scmp.eq.s32.totalorder %s13, 7
    %p142 = por %p140, %p141
    %p143 = scmp.ne.s32.totalorder %s135, %s138
    %p144 = scmp.eq.s32.totalorder %s13, 0
    %p145 = por %p143, %p144
    %p146 = scmp.ne.s32.totalorder %s135, %s138
    %p147 = scmp.eq.s32.totalorder %s18, 7
    %p148 = por %p146, %p147
    %p149 = scmp.ne.s32.totalorder %s138, %s139
    %p150 = scmp.eq.s32.totalorder %s18, 0
    %p151 = por %p149, %p150
    %p152 = scmp.ne.s32.totalorder %s138, %s139
    %p153 = scmp.eq.s32.totalorder %s19, 7
    %p154 = por %p152, %p153
    %p156 = scmp.ne.s32.totalorder %s139, %s155
    %p157 = scmp.eq.s32.totalorder %s19, 0
    %p158 = por %p156, %p157
    %s159 = ssub.s32 %s20, %s32
    %s160 = ssub.s32 %s21, %s28
    %s161 = sor.u32 %s159, %s160
    %p162 = scmp.eq.s32.totalorder %s161, 0
    %s164 = sadd.s32 %s163, 1
    %s165 = scalar_select %p162, %s163, %s164
    %p168 = pneg %p162
    %p169 = scmp.eq.s32.totalorder %s13, 7
    %p170 = por %p168, %p169
    %p171 = scmp.ne.s32.totalorder %s163, %s166
    %p172 = scmp.eq.s32.totalorder %s13, 0
    %p173 = por %p171, %p172
    %p174 = scmp.ne.s32.totalorder %s163, %s166
    %p175 = scmp.eq.s32.totalorder %s18, 7
    %p176 = por %p174, %p175
    %p177 = scmp.ne.s32.totalorder %s166, %s167
    %p178 = scmp.eq.s32.totalorder %s18, 0
    %p179 = por %p177, %p178
    %p180 = scmp.ne.s32.totalorder %s166, %s167
    %p181 = scmp.eq.s32.totalorder %s19, 7
    %p182 = por %p180, %p181
    %p184 = scmp.ne.s32.totalorder %s167, %s183
    %p185 = scmp.eq.s32.totalorder %s19, 0
    %p186 = por %p184, %p185
    %s187 = ssub.s32 %s20, %s32
    %s188 = ssub.s32 %s21, %s28
    %s189 = sor.u32 %s187, %s188
    %p190 = scmp.eq.s32.totalorder %s189, 0
    %s192 = sadd.s32 %s191, 1
    %s193 = scalar_select %p190, %s191, %s192
    %p196 = pneg %p190
    %p197 = scmp.eq.s32.totalorder %s13, 7
    %p198 = por %p196, %p197
    %p199 = scmp.ne.s32.totalorder %s191, %s194
    %p200 = scmp.eq.s32.totalorder %s13, 0
    %p201 = por %p199, %p200
    %p202 = scmp.ne.s32.totalorder %s191, %s194
    %p203 = scmp.eq.s32.totalorder %s18, 7
    %p204 = por %p202, %p203
    %p205 = scmp.ne.s32.totalorder %s194, %s195
    %p206 = scmp.eq.s32.totalorder %s18, 0
    %p207 = por %p205, %p206
    %p208 = scmp.ne.s32.totalorder %s194, %s195
    %p209 = scmp.eq.s32.totalorder %s19, 7
    %p210 = por %p208, %p209
    %p212 = scmp.ne.s32.totalorder %s195, %s211
    %p213 = scmp.eq.s32.totalorder %s19, 0
    %p214 = por %p212, %p213
    %p215 = scmp.le.s32.totalorder 1, %s13
    %p216 = scmp.lt.s32.totalorder %s13, 9
    %p217 = pnand %p215, %p216
    %p218 = pneg %p217
    // Predicated region
    $region9: #{tpu_custom_call.1} parent=5 // pred_check
      _
    $region10: #{tpu_custom_call.1} parent=5 // pred_check_branch
      %220 = sbr.rel (%p217) target = $region12
    $region11: #{tpu_custom_call.1} parent=5 // pred_region
      %s221 = ssub.s32 %s13, 1
      // Predicated region
      $region13: #{tpu_custom_call.1} parent=11 // pred_check
        %p222 = pneg %p74
      $region14: #{tpu_custom_call.1} parent=11 // pred_check_branch
        %224 = sbr.rel (%p222) target = $region16
      $region15: #{tpu_custom_call.1} parent=11 // pred_region
        _
      $region16: #{tpu_custom_call.1} parent=11 // pred_fallthru
        _
      // Predicated region
      $region17: #{tpu_custom_call.1} parent=11 // pred_check
        %p225 = pneg %p95
      $region18: #{tpu_custom_call.1} parent=11 // pred_check_branch
        %227 = sbr.rel (%p225) target = $region20
      $region19: #{tpu_custom_call.1} parent=11 // pred_region
        _
      $region20: #{tpu_custom_call.1} parent=11 // pred_fallthru
        _
    $region12: #{tpu_custom_call.1} parent=5 // pred_fallthru
      _
    %p228 = scmp.lt.s32.totalorder %s13, 8
    // Predicated region
    $region21: #{tpu_custom_call.1} parent=5 // pred_check
      %p229 = pneg %p228
    $region22: #{tpu_custom_call.1} parent=5 // pred_check_branch
      %231 = sbr.rel (%p229) target = $region24
    $region23: #{tpu_custom_call.1} parent=5 // pred_region
      // Predicated region
      $region25: #{tpu_custom_call.1} parent=23 // pred_check
        %p232 = pneg %p47
      $region26: #{tpu_custom_call.1} parent=23 // pred_check_branch
        %234 = sbr.rel (%p232) target = $region28
      $region27: #{tpu_custom_call.1} parent=23 // pred_region
        %s235 = smul.u32 8, %s21
        %p236 = scmp.lt.s32.totalorder %s20, 1
        %s237 = scalar_select %p236, %s20, 1
        %p238 = scmp.lt.s32.totalorder %s235, 31
        %s239 = scalar_select %p238, %s235, 31
        %s240 = smul.addr %s237, 32
        %s241 = sadd.s32 %s239, %s240
        %s242 = smul.addr %s241, 8
        %s243 = scalar_lea.vmem %s0, %s242
        %s244 = smul.u32 8, %s21
      $region28: #{tpu_custom_call.1} parent=23 // pred_fallthru
        _
    $region24: #{tpu_custom_call.1} parent=5 // pred_fallthru
      _
    %p245 = scmp.le.s32.totalorder 1, %s13
    %p246 = scmp.lt.s32.totalorder %s13, 9
    %p247 = pnand %p245, %p246
    %p248 = pneg %p247
    // Predicated region
    $region29: #{tpu_custom_call.1} parent=5 // pred_check
      _
    $region30: #{tpu_custom_call.1} parent=5 // pred_check_branch
      %250 = sbr.rel (%p247) target = $region32
    $region31: #{tpu_custom_call.1} parent=5 // pred_region
      %s251 = ssub.s32 %s13, 1
      %s252 = smul.u32 8, %s23
      %p253 = scmp.lt.s32.totalorder %s22, 1
      %s254 = scalar_select %p253, %s22, 1
      %p255 = scmp.lt.s32.totalorder %s252, 31
      %s256 = scalar_select %p255, %s252, 31
      %s257 = smul.addr %s254, 32
      %s258 = sadd.s32 %s256, %s257
      %s259 = smul.addr %s258, 8
      %s260 = scalar_lea.vmem %s0, %s259
      %p261 = pneg %p53
      %p262 = pneg %p50
      %p263 = pneg %p74
      %p264 = pneg %p71
      %p265 = pneg %p95
      %p266 = pneg %p92
      %p267 = pneg %p123
      %p268 = pneg %p120
      %s269 = smul.u32 8, %s23
      %p270 = scmp.lt.s32.totalorder %s22, 1
      %s271 = scalar_select %p270, %s22, 1
      %p272 = scmp.lt.s32.totalorder %s269, 31
      %s273 = scalar_select %p272, %s269, 31
      %s274 = smul.addr %s271, 32
      %s275 = sadd.s32 %s273, %s274
      %s276 = smul.addr %s275, 4
      %s277 = scalar_lea.vmem %s3, %s276
      %p278 = pneg %p151
      %p279 = pneg %p148
      %s280 = smul.u32 8, %s23
      %p281 = scmp.lt.s32.totalorder %s22, 1
      %s282 = scalar_select %p281, %s22, 1
      %p283 = scmp.lt.s32.totalorder %s280, 31
      %s284 = scalar_select %p283, %s280, 31
      %s285 = smul.addr %s282, 32
      %s286 = sadd.s32 %s284, %s285
      %s287 = smul.addr %s286, 4
      %s288 = scalar_lea.vmem %s4, %s287
      %p289 = pneg %p179
      %p290 = pneg %p176
      %s291 = smul.u32 8, %s23
      %p292 = scmp.lt.s32.totalorder %s22, 1
      %s293 = scalar_select %p292, %s22, 1
      %p294 = scmp.lt.s32.totalorder %s291, 31
      %s295 = scalar_select %p294, %s291, 31
      %s296 = smul.addr %s293, 32
      %s297 = sadd.s32 %s295, %s296
      %s298 = smul.addr %s297, 4
      %s299 = scalar_lea.vmem %s5, %s298
      %p300 = pneg %p207
      %p301 = pneg %p204
      %s302 = smul.u32 8, %s23
      %p303 = scmp.lt.s32.totalorder %s22, 1
      %s304 = scalar_select %p303, %s22, 1
      %p305 = scmp.lt.s32.totalorder %s302, 31
      %s306 = scalar_select %p305, %s302, 31
      %s307 = smul.addr %s304, 32
      %s308 = sadd.s32 %s306, %s307
      %s309 = smul.addr %s308, 4
      %s310 = scalar_lea.vmem %s6, %s309
      %s311 = smul.u32 8, %s23
      %p312 = scmp.lt.s32.totalorder %s22, 1
      %s313 = scalar_select %p312, %s22, 1
      %p314 = scmp.lt.s32.totalorder %s311, 31
      %s315 = scalar_select %p314, %s311, 31
      %s316 = smul.addr %s313, 32
      %s317 = sadd.s32 %s315, %s316
      %s318 = smul.addr %s317, 8
      %s319 = scalar_lea.vmem %s0, %s318
      %s320 = smul.u32 8, %s23
      %s321 = smul.u32 8, %s23
      %p322 = scmp.lt.s32.totalorder %s22, 1
      %s323 = scalar_select %p322, %s22, 1
      %p324 = scmp.lt.s32.totalorder %s321, 31
      %s325 = scalar_select %p324, %s321, 31
      %s326 = smul.addr %s323, 32
      %s327 = sadd.s32 %s325, %s326
      %s328 = smul.addr %s327, 4
      %s329 = scalar_lea.vmem %s3, %s328
      %s330 = smul.u32 8, %s23
      %s331 = smul.u32 8, %s23
      %p332 = scmp.lt.s32.totalorder %s22, 1
      %s333 = scalar_select %p332, %s22, 1
      %p334 = scmp.lt.s32.totalorder %s331, 31
      %s335 = scalar_select %p334, %s331, 31
      %s336 = smul.addr %s333, 32
      %s337 = sadd.s32 %s335, %s336
      %s338 = smul.addr %s337, 4
      %s339 = scalar_lea.vmem %s4, %s338
      %s340 = smul.u32 8, %s23
      %s341 = smul.u32 8, %s23
      %p342 = scmp.lt.s32.totalorder %s22, 1
      %s343 = scalar_select %p342, %s22, 1
      %p344 = scmp.lt.s32.totalorder %s341, 31
      %s345 = scalar_select %p344, %s341, 31
      %s346 = smul.addr %s343, 32
      %s347 = sadd.s32 %s345, %s346
      %s348 = smul.addr %s347, 4
      %s349 = scalar_lea.vmem %s5, %s348
      %s350 = smul.u32 8, %s23
      %s351 = smul.u32 8, %s23
      %p352 = scmp.lt.s32.totalorder %s22, 1
      %s353 = scalar_select %p352, %s22, 1
      %p354 = scmp.lt.s32.totalorder %s351, 31
      %s355 = scalar_select %p354, %s351, 31
      %s356 = smul.addr %s353, 32
      %s357 = sadd.s32 %s355, %s356
      %s358 = smul.addr %s357, 4
      %s359 = scalar_lea.vmem %s6, %s358
      %s360 = smul.u32 8, %s23
      %v362 = vld [vmem:[%s319] sm:$0xff]
      %v363 = vld [vmem:[%s319 + $0x8] sm:$0xff]
      %v364 = vld [vmem:[%s319 + $0x10] sm:$0xff]
      %v365 = vld [vmem:[%s319 + $0x18] sm:$0xff]
      %v366 = vld [vmem:[%s319 + $0x20] sm:$0xff]
      %v367 = vld [vmem:[%s319 + $0x28] sm:$0xff]
      %v368 = vld [vmem:[%s319 + $0x30] sm:$0xff]
      %v369 = vld [vmem:[%s319 + $0x38] sm:$0xff]
      %v370 = vpack.c.bf16 %v363, %v362
      %v371 = vpack.c.bf16 %v365, %v364
      %v372 = vpack.c.bf16 %v367, %v366
      %v373 = vpack.c.bf16 %v369, %v368
      %v374 = vld [vmem:[%s1] sm:$0xf]
      %v375 = vld [vmem:[%s1 + $0x4] sm:$0xf]
      %v376 = vld [vmem:[%s2] sm:$0x1]
      %v378 = vlaneseq
      %v379 = vshrl.u32 %v378, 7
      %v380 = vsub.s32 0, %v379
      %v381 = vrot.slane %v376, %v380
      %v385 = vunpack.c.l.b16 %v374
      %v386 = vunpack.c.l.b16 %v375
      %v387 = vpack.c.b16 %v386, %v385
      %vm389 = vcmask 130048
      %v391 = vsel %vm389, %v370, 0
      %v394 = vsel %vm389, %v371, 0
      %v397 = vsel %vm389, %v372, 0
      %v400 = vsel %vm389, %v373, 0
      %402 = vmatprep.subr.bf16.mxu0 0
      %403 = vmatpush1.bf16.msra.mxu0 %v387
      %404 = vmatprep.subr.bf16.mxu0 0
      %405 = vmatpush1.bf16.msra.mxu0 0
      %406 = vmatprep.subr.bf16.mxu0 0
      %407 = vmatpush1.bf16.msra.mxu0 0
      %408 = vmatprep.subr.bf16.mxu0 0
      %409 = vmatpush1.bf16.msra.mxu0 0
      %410 = vmatprep.subr.bf16.mxu0 0
      %411 = vmatpush1.bf16.msra.mxu0 0
      %412 = vmatprep.subr.bf16.mxu0 0
      %413 = vmatpush1.bf16.msra.mxu0 0
      %414 = vmatprep.subr.bf16.mxu0 0
      %415 = vmatpush1.bf16.msra.mxu0 0
      %416 = vmatprep.subr.bf16.mxu0 0
      %417 = vmatpush1.bf16.msra.mxu0 0
      %418 = vmatprep.subr.bf16.mxu0 0
      %419 = vmatpush1.bf16.msra.mxu0 0
      %420 = vmatprep.subr.bf16.mxu0 0
      %421 = vmatpush1.bf16.msra.mxu0 0
      %422 = vmatprep.subr.bf16.mxu0 0
      %423 = vmatpush1.bf16.msra.mxu0 0
      %424 = vmatprep.subr.bf16.mxu0 0
      %425 = vmatpush1.bf16.msra.mxu0 0
      %426 = vmatprep.subr.bf16.mxu0 0
      %427 = vmatpush1.bf16.msra.mxu0 0
      %428 = vmatprep.subr.bf16.mxu0 0
      %429 = vmatpush1.bf16.msra.mxu0 0
      %430 = vmatprep.subr.bf16.mxu0 0
      %431 = vmatpush1.bf16.msra.mxu0 0
      %432 = vmatprep.subr.bf16.mxu0 0
      %433 = vmatpush1.bf16.msra.mxu0 0
      %434 = vmatprep.mubr.bf16.mxu0 0
      %435 = vmatmul.mubr.bf16.gmra.mrb[0].mxu0 %v391
      %v436 = vpop.f32.mrb[0].mxu0
      %v437 = vadd.f32 %v381, %v436
      %v438 = vpop.f32.mrb[0].mxu0
      %v439 = vpop.f32.mrb[0].mxu0
      %v440 = vadd.f32 %v381, %v439
      %v441 = vpop.f32.mrb[0].mxu0
      %442 = vmatprep.mubr.bf16.mxu0 0
      %443 = vmatmul.mubr.bf16.gmra.mrb[0].mxu0 %v394
      %v444 = vpop.f32.mrb[0].mxu0
      %v445 = vadd.f32 %v381, %v444
      %v446 = vpop.f32.mrb[0].mxu0
      %v447 = vpop.f32.mrb[0].mxu0
      %v448 = vadd.f32 %v381, %v447
      %v449 = vpop.f32.mrb[0].mxu0
      %450 = vmatprep.mubr.bf16.mxu0 0
      %451 = vmatmul.mubr.bf16.gmra.mrb[0].mxu0 %v397
      %v452 = vpop.f32.mrb[0].mxu0
      %v453 = vadd.f32 %v381, %v452
      %v454 = vpop.f32.mrb[0].mxu0
      %v455 = vpop.f32.mrb[0].mxu0
      %v456 = vadd.f32 %v381, %v455
      %v457 = vpop.f32.mrb[0].mxu0
      %458 = vmatprep.mubr.bf16.mxu0 0
      %459 = vmatmul.mubr.bf16.gmra.mrb[0].mxu0 %v400
      %v460 = vpop.f32.mrb[0].mxu0
      %v461 = vadd.f32 %v381, %v460
      %v462 = vpop.f32.mrb[0].mxu0
      %v463 = vpop.f32.mrb[0].mxu0
      %v464 = vadd.f32 %v381, %v463
      %v465 = vpop.f32.mrb[0].mxu0
      %466 = vdwg.mxu0
      %v467 = vmax.f32 %v437, 0.0
      %v468 = vmax.f32 %v440, 0.0
      %v469 = vmax.f32 %v445, 0.0
      %v470 = vmax.f32 %v448, 0.0
      %v471 = vmax.f32 %v453, 0.0
      %v472 = vmax.f32 %v456, 0.0
      %v473 = vmax.f32 %v461, 0.0
      %v474 = vmax.f32 %v464, 0.0
      %v475 = vpack.c.bf16 %v468, %v467
      %v476 = vpack.c.bf16 %v470, %v469
      %v477 = vpack.c.bf16 %v472, %v471
      %v478 = vpack.c.bf16 %v474, %v473
      %v483 = vunpack.c.l.b16 %v475
      %v484 = vunpack.c.h.b16 %v475
      %v485 = vunpack.c.l.b16 %v476
      %v486 = vunpack.c.h.b16 %v476
      %v487 = vunpack.c.l.b16 %v477
      %v488 = vunpack.c.h.b16 %v477
      %v489 = vunpack.c.l.b16 %v478
      %v490 = vunpack.c.h.b16 %v478
      %v491 = vpack.c.b16 %v483, %v483
      %v492 = vpack.c.b16 %v484, %v484
      %v493 = vpack.c.b16 %v485, %v485
      %v494 = vpack.c.b16 %v486, %v486
      %v495 = vpack.c.b16 %v487, %v487
      %v496 = vpack.c.b16 %v488, %v488
      %v497 = vpack.c.b16 %v489, %v489
      %v498 = vpack.c.b16 %v490, %v490
      %vm507 = vcmask 27648
      %508 = vst.msk [vmem:[%s329] sm:$0xf] %vm507, %v491
      %509 = vst.msk [vmem:[%s329 + $0x4] sm:$0xf] %vm507, %v492
      %510 = vst.msk [vmem:[%s329 + $0x8] sm:$0xf] %vm507, %v493
      %511 = vst.msk [vmem:[%s329 + $0xc] sm:$0xf] %vm507, %v494
      %512 = vst.msk [vmem:[%s329 + $0x10] sm:$0xf] %vm507, %v495
      %513 = vst.msk [vmem:[%s329 + $0x14] sm:$0xf] %vm507, %v496
      %514 = vst.msk [vmem:[%s329 + $0x18] sm:$0xf] %vm507, %v497
      %515 = vst.msk [vmem:[%s329 + $0x1c] sm:$0xf] %vm507, %v498
      %516 = vrot.lane.b32.xlu0 %v491, 124
      %v517 = vpop.permute.xlu0 %516
      %518 = vrot.lane.b32.xlu0 %v492, 124
      %v519 = vpop.permute.xlu0 %518
      %520 = vrot.lane.b32.xlu0 %v493, 124
      %v521 = vpop.permute.xlu0 %520
      %522 = vrot.lane.b32.xlu0 %v494, 124
      %v523 = vpop.permute.xlu0 %522
      %524 = vrot.lane.b32.xlu0 %v495, 124
      %v525 = vpop.permute.xlu0 %524
      %526 = vrot.lane.b32.xlu0 %v496, 124
      %v527 = vpop.permute.xlu0 %526
      %528 = vrot.lane.b32.xlu0 %v497, 124
      %v529 = vpop.permute.xlu0 %528
      %530 = vrot.lane.b32.xlu0 %v498, 124
      %v531 = vpop.permute.xlu0 %530
      %540 = vst.msk [vmem:[%s339] sm:$0xf] %vm507, %v517
      %541 = vst.msk [vmem:[%s339 + $0x4] sm:$0xf] %vm507, %v519
      %542 = vst.msk [vmem:[%s339 + $0x8] sm:$0xf] %vm507, %v521
      %543 = vst.msk [vmem:[%s339 + $0xc] sm:$0xf] %vm507, %v523
      %544 = vst.msk [vmem:[%s339 + $0x10] sm:$0xf] %vm507, %v525
      %545 = vst.msk [vmem:[%s339 + $0x14] sm:$0xf] %vm507, %v527
      %546 = vst.msk [vmem:[%s339 + $0x18] sm:$0xf] %vm507, %v529
      %547 = vst.msk [vmem:[%s339 + $0x1c] sm:$0xf] %vm507, %v531
      %548 = vrot.lane.b32.xlu0 %v491, 120
      %v549 = vpop.permute.xlu0 %548
      %550 = vrot.lane.b32.xlu0 %v492, 120
      %v551 = vpop.permute.xlu0 %550
      %552 = vrot.lane.b32.xlu0 %v493, 120
      %v553 = vpop.permute.xlu0 %552
      %554 = vrot.lane.b32.xlu0 %v494, 120
      %v555 = vpop.permute.xlu0 %554
      %556 = vrot.lane.b32.xlu0 %v495, 120
      %v557 = vpop.permute.xlu0 %556
      %558 = vrot.lane.b32.xlu0 %v496, 120
      %v559 = vpop.permute.xlu0 %558
      %560 = vrot.lane.b32.xlu0 %v497, 120
      %v561 = vpop.permute.xlu0 %560
      %562 = vrot.lane.b32.xlu0 %v498, 120
      %v563 = vpop.permute.xlu0 %562
      %572 = vst.msk [vmem:[%s349] sm:$0xf] %vm507, %v549
      %573 = vst.msk [vmem:[%s349 + $0x4] sm:$0xf] %vm507, %v551
      %574 = vst.msk [vmem:[%s349 + $0x8] sm:$0xf] %vm507, %v553
      %575 = vst.msk [vmem:[%s349 + $0xc] sm:$0xf] %vm507, %v555
      %576 = vst.msk [vmem:[%s349 + $0x10] sm:$0xf] %vm507, %v557
      %577 = vst.msk [vmem:[%s349 + $0x14] sm:$0xf] %vm507, %v559
      %578 = vst.msk [vmem:[%s349 + $0x18] sm:$0xf] %vm507, %v561
      %579 = vst.msk [vmem:[%s349 + $0x1c] sm:$0xf] %vm507, %v563
      %580 = vrot.lane.b32.xlu0 %v491, 116
      %v581 = vpop.permute.xlu0 %580
      %582 = vrot.lane.b32.xlu0 %v492, 116
      %v583 = vpop.permute.xlu0 %582
      %584 = vrot.lane.b32.xlu0 %v493, 116
      %v585 = vpop.permute.xlu0 %584
      %586 = vrot.lane.b32.xlu0 %v494, 116
      %v587 = vpop.permute.xlu0 %586
      %588 = vrot.lane.b32.xlu0 %v495, 116
      %v589 = vpop.permute.xlu0 %588
      %590 = vrot.lane.b32.xlu0 %v496, 116
      %v591 = vpop.permute.xlu0 %590
      %592 = vrot.lane.b32.xlu0 %v497, 116
      %v593 = vpop.permute.xlu0 %592
      %594 = vrot.lane.b32.xlu0 %v498, 116
      %v595 = vpop.permute.xlu0 %594
      %604 = vst.msk [vmem:[%s359] sm:$0xf] %vm507, %v581
      %605 = vst.msk [vmem:[%s359 + $0x4] sm:$0xf] %vm507, %v583
      %606 = vst.msk [vmem:[%s359 + $0x8] sm:$0xf] %vm507, %v585
      %607 = vst.msk [vmem:[%s359 + $0xc] sm:$0xf] %vm507, %v587
      %608 = vst.msk [vmem:[%s359 + $0x10] sm:$0xf] %vm507, %v589
      %609 = vst.msk [vmem:[%s359 + $0x14] sm:$0xf] %vm507, %v591
      %610 = vst.msk [vmem:[%s359 + $0x18] sm:$0xf] %vm507, %v593
      %611 = vst.msk [vmem:[%s359 + $0x1c] sm:$0xf] %vm507, %v595
      %s612 = smul.u32 8, %s23
      %p613 = scmp.lt.s32.totalorder %s22, 1
      %s614 = scalar_select %p613, %s22, 1
      %p615 = scmp.lt.s32.totalorder %s612, 31
      %s616 = scalar_select %p615, %s612, 31
      %s617 = smul.addr %s614, 32
      %s618 = sadd.s32 %s616, %s617
      %s619 = smul.addr %s618, 4
      %s620 = scalar_lea.vmem %s3, %s619
      %s621 = smul.u32 8, %s23
      %p622 = scmp.lt.s32.totalorder %s22, 1
      %s623 = scalar_select %p622, %s22, 1
      %p624 = scmp.lt.s32.totalorder %s621, 31
      %s625 = scalar_select %p624, %s621, 31
      %s626 = smul.addr %s623, 32
      %s627 = sadd.s32 %s625, %s626
      %s628 = smul.addr %s627, 4
      %s629 = scalar_lea.vmem %s4, %s628
      %s630 = smul.u32 8, %s23
      %p631 = scmp.lt.s32.totalorder %s22, 1
      %s632 = scalar_select %p631, %s22, 1
      %p633 = scmp.lt.s32.totalorder %s630, 31
      %s634 = scalar_select %p633, %s630, 31
      %s635 = smul.addr %s632, 32
      %s636 = sadd.s32 %s634, %s635
      %s637 = smul.addr %s636, 4
      %s638 = scalar_lea.vmem %s5, %s637
      %s639 = smul.u32 8, %s23
      %p640 = scmp.lt.s32.totalorder %s22, 1
      %s641 = scalar_select %p640, %s22, 1
      %p642 = scmp.lt.s32.totalorder %s639, 31
      %s643 = scalar_select %p642, %s639, 31
      %s644 = smul.addr %s641, 32
      %s645 = sadd.s32 %s643, %s644
      %s646 = smul.addr %s645, 4
      %s647 = scalar_lea.vmem %s6, %s646
      // Predicated region
      $region33: #{tpu_custom_call.1} parent=31 // pred_check
        %p648 = pneg %p120
      $region34: #{tpu_custom_call.1} parent=31 // pred_check_branch
        %650 = sbr.rel (%p648) target = $region36
      $region35: #{tpu_custom_call.1} parent=31 // pred_region
        %s651 = smul.u32 8, %s23
      $region36: #{tpu_custom_call.1} parent=31 // pred_fallthru
        _
      // Predicated region
      $region37: #{tpu_custom_call.1} parent=31 // pred_check
        %p652 = pneg %p148
      $region38: #{tpu_custom_call.1} parent=31 // pred_check_branch
        %654 = sbr.rel (%p652) target = $region40
      $region39: #{tpu_custom_call.1} parent=31 // pred_region
        %s655 = smul.u32 8, %s23
      $region40: #{tpu_custom_call.1} parent=31 // pred_fallthru
        _
      // Predicated region
      $region41: #{tpu_custom_call.1} parent=31 // pred_check
        %p656 = pneg %p176
      $region42: #{tpu_custom_call.1} parent=31 // pred_check_branch
        %658 = sbr.rel (%p656) target = $region44
      $region43: #{tpu_custom_call.1} parent=31 // pred_region
        %s659 = smul.u32 8, %s23
      $region44: #{tpu_custom_call.1} parent=31 // pred_fallthru
        _
      // Predicated region
      $region45: #{tpu_custom_call.1} parent=31 // pred_check
        %p660 = pneg %p204
      $region46: #{tpu_custom_call.1} parent=31 // pred_check_branch
        %662 = sbr.rel (%p660) target = $region48
      $region47: #{tpu_custom_call.1} parent=31 // pred_region
        %s663 = smul.u32 8, %s23
      $region48: #{tpu_custom_call.1} parent=31 // pred_fallthru
        _
    $region32: #{tpu_custom_call.1} parent=5 // pred_fallthru
      _
    %p664 = scmp.le.s32.totalorder 2, %s13
    // Predicated region
    $region49: #{tpu_custom_call.1} parent=5 // pred_check
      %p665 = pneg %p664
    $region50: #{tpu_custom_call.1} parent=5 // pred_check_branch
      %667 = sbr.rel (%p665) target = $region52
    $region51: #{tpu_custom_call.1} parent=5 // pred_region
      %s668 = ssub.s32 %s13, 2
      // Predicated region
      $region53: #{tpu_custom_call.1} parent=51 // pred_check
        %p669 = pneg %p126
      $region54: #{tpu_custom_call.1} parent=51 // pred_check_branch
        %671 = sbr.rel (%p669) target = $region56
      $region55: #{tpu_custom_call.1} parent=51 // pred_region
        %s672 = smul.u32 8, %s25
        %p673 = scmp.lt.s32.totalorder %s24, 1
        %s674 = scalar_select %p673, %s24, 1
        %p675 = scmp.lt.s32.totalorder %s672, 31
        %s676 = scalar_select %p675, %s672, 31
        %s677 = smul.addr %s674, 32
        %s678 = sadd.s32 %s676, %s677
        %s679 = smul.addr %s678, 4
        %s680 = scalar_lea.vmem %s3, %s679
      $region56: #{tpu_custom_call.1} parent=51 // pred_fallthru
        _
      // Predicated region
      $region57: #{tpu_custom_call.1} parent=51 // pred_check
        %p681 = pneg %p154
      $region58: #{tpu_custom_call.1} parent=51 // pred_check_branch
        %683 = sbr.rel (%p681) target = $region60
      $region59: #{tpu_custom_call.1} parent=51 // pred_region
        %s684 = smul.u32 8, %s25
        %p685 = scmp.lt.s32.totalorder %s24, 1
        %s686 = scalar_select %p685, %s24, 1
        %p687 = scmp.lt.s32.totalorder %s684, 31
        %s688 = scalar_select %p687, %s684, 31
        %s689 = smul.addr %s686, 32
        %s690 = sadd.s32 %s688, %s689
        %s691 = smul.addr %s690, 4
        %s692 = scalar_lea.vmem %s4, %s691
      $region60: #{tpu_custom_call.1} parent=51 // pred_fallthru
        _
      // Predicated region
      $region61: #{tpu_custom_call.1} parent=51 // pred_check
        %p693 = pneg %p182
      $region62: #{tpu_custom_call.1} parent=51 // pred_check_branch
        %695 = sbr.rel (%p693) target = $region64
      $region63: #{tpu_custom_call.1} parent=51 // pred_region
        %s696 = smul.u32 8, %s25
        %p697 = scmp.lt.s32.totalorder %s24, 1
        %s698 = scalar_select %p697, %s24, 1
        %p699 = scmp.lt.s32.totalorder %s696, 31
        %s700 = scalar_select %p699, %s696, 31
        %s701 = smul.addr %s698, 32
        %s702 = sadd.s32 %s700, %s701
        %s703 = smul.addr %s702, 4
        %s704 = scalar_lea.vmem %s5, %s703
      $region64: #{tpu_custom_call.1} parent=51 // pred_fallthru
        _
      // Predicated region
      $region65: #{tpu_custom_call.1} parent=51 // pred_check
        %p705 = pneg %p210
      $region66: #{tpu_custom_call.1} parent=51 // pred_check_branch
        %707 = sbr.rel (%p705) target = $region68
      $region67: #{tpu_custom_call.1} parent=51 // pred_region
        %s708 = smul.u32 8, %s25
        %p709 = scmp.lt.s32.totalorder %s24, 1
        %s710 = scalar_select %p709, %s24, 1
        %p711 = scmp.lt.s32.totalorder %s708, 31
        %s712 = scalar_select %p711, %s708, 31
        %s713 = smul.addr %s710, 32
        %s714 = sadd.s32 %s712, %s713
        %s715 = smul.addr %s714, 4
        %s716 = scalar_lea.vmem %s6, %s715
      $region68: #{tpu_custom_call.1} parent=51 // pred_fallthru
        _
    $region52: #{tpu_custom_call.1} parent=5 // pred_fallthru
      _
  $region6: #{tpu_custom_call.1} parent=0 // loop_footer
    %s17 = sadd.s32 1, %s13
  $region7: #{tpu_custom_call.1} parent=0 // loop_footer_branch
    %12 = sbr.rel target = $region3
  $region8: #{tpu_custom_call.1} parent=0 // loop_exit
    _

</llo_original>
